<compile_context>
chip_gen: v7x
topology: tpu7x:2x2x1
jax: 0.10.0
libtpu: 0.0.40
codegen_flags: <defaults>
</compile_context>

<pallas_src>
import functools

import jax
import jax.numpy as jnp
from jax.experimental import pallas as pl
from jax.experimental.pallas import tpu as pltpu


# -----------------------------------------------------------------------------
# Kernel: one (TB, Cin*L) slab of samples per grid step.
#   y[b, o, l] = sum_{c} ( w[o,c,0]*x[b,c,l-1] + w[o,c,1]*x[b,c,l]
#                        + w[o,c,2]*x[b,c,l+1] )  + bias[o]      (circular in l)
# -----------------------------------------------------------------------------
def saconv_kernel(x_ref, w_ref, b_ref, o_ref, *, cin, cout, length):
    # w_ref: SMEM f32[Cout*Cin*3], flat index (o*Cin + c)*3 + k  (k: 0->l-1,1->l,2->l+1)
    # b_ref: SMEM f32[Cout]
    accs = [None] * cout
    for c in range(cin):
        xc = x_ref[:, c * length:(c + 1) * length]           # (TB, L) lane-aligned slab
        xm = pltpu.roll(xc, shift=1, axis=1)                  # x[(l-1) mod L] per sample
        xp = pltpu.roll(xc, shift=length - 1, axis=1)         # x[(l+1) mod L] per sample
        for o in range(cout):
            base = (o * cin + c) * 3
            term = w_ref[base] * xm + w_ref[base + 1] * xc + w_ref[base + 2] * xp
            accs[o] = term if c == 0 else accs[o] + term
    for o in range(cout):
        o_ref[:, o * length:(o + 1) * length] = accs[o] + b_ref[o]


# -----------------------------------------------------------------------------
# Wrapper
# -----------------------------------------------------------------------------
def _round_up(v, m):
    return ((v + m - 1) // m) * m


def _pick_tb(n, tb_max):
    """Batch tile: multiple of 8 sublanes, capped by VMEM budget, >=2 grid blocks."""
    tb = min(tb_max, max(8, _round_up(n, 8)))
    if n > 8 and pl.cdiv(n, tb) < 2:          # give both v7x TensorCores work
        tb = max(8, _round_up(pl.cdiv(n, 2), 8))
    return tb


def scale_aware_conv1d_alt(x, dx, w, b, ps, *, tb_max=512):
    """x: (N, Cin, L) f32; w: (P, Cout, Cin, 3) f32; b: (Cout,) or None; ps: scale powers."""
    n, cin, length = x.shape
    num_p, cout, cin_w, ksize = w.shape
    assert ksize == 3 and num_p == len(ps) and cin_w == cin

    # Fold dx**p into an effective weight once, in the wrapper (review item).
    dx = jnp.asarray(dx, jnp.float32)
    dxp = jnp.stack([dx ** p for p in ps]).astype(jnp.float32)            # (P,)
    w_eff = jnp.einsum("p,pock->ock", dxp, w.astype(jnp.float32))         # (Cout, Cin, 3)
    w_flat = w_eff.reshape(-1)                                            # (Cout*Cin*3,)

    if b is None:
        b = jnp.zeros((cout,), jnp.float32)
    b = b.astype(jnp.float32)

    # Channels onto lanes: free (layout-compatible) reshape.
    x2 = x.astype(jnp.float32).reshape(n, cin * length)

    tb = _pick_tb(n, tb_max)
    n_pad = pl.cdiv(n, tb) * tb
    if n_pad != n:
        x2 = jnp.pad(x2, ((0, n_pad - n), (0, 0)))

    kern = functools.partial(saconv_kernel, cin=cin, cout=cout, length=length)
    y2 = pl.pallas_call(
        kern,
        out_shape=jax.ShapeDtypeStruct((n_pad, cout * length), jnp.float32),
        grid_spec=pltpu.PrefetchScalarGridSpec(
            num_scalar_prefetch=0,
            grid=(n_pad // tb,),
            in_specs=[
                pl.BlockSpec((tb, cin * length), lambda i: (i, 0)),        # x slab
                pl.BlockSpec(memory_space=pltpu.MemorySpace.SMEM),         # w_eff scalars
                pl.BlockSpec(memory_space=pltpu.MemorySpace.SMEM),         # bias scalars
            ],
            out_specs=pl.BlockSpec((tb, cout * length), lambda i: (i, 0)),
        ),
        compiler_params=pltpu.CompilerParams(
            dimension_semantics=("parallel",),       # shard batch blocks over v7x's 2 TCs
            vmem_limit_bytes=32 * 1024 * 1024,       # headroom on v7x's 64 MiB VMEM
        ),
    )(x2, w_flat, b)

    return y2[:n].reshape(n, cout, length)


# -----------------------------------------------------------------------------
# Pure-JAX reference (matches the PyTorch module's forward)
# -----------------------------------------------------------------------------
def reference(x, dx, w, b, ps):
    taps = jnp.stack(
        [jnp.roll(x, 1, axis=-1), x, jnp.roll(x, -1, axis=-1)], axis=-1
    )                                                   # (N, Cin, L, 3)
    dx = jnp.asarray(dx, jnp.float32)
    dxp = jnp.stack([dx ** p for p in ps]).astype(jnp.float32)
    y = jnp.einsum("p,pock,nclk->nol", dxp, w, taps)
    if b is not None:
        y = y + b[None, :, None]
    return y


if __name__ == "__main__":
    key = jax.random.PRNGKey(0)
    kx, kw, kb = jax.random.split(key, 3)

    N, Cin, Cout, L = 16, 4, 8, 128     # L=128 -> lane-tile-aligned channel slabs
    ps = (0, -1)                        # module default scale powers
    dx = 0.5

    x = jax.random.normal(kx, (N, Cin, L), jnp.float32)
    bound = 1.0 / (Cin * 3) ** 0.5      # PyTorch Conv1d default init bound
    w = jax.random.uniform(kw, (len(ps), Cout, Cin, 3), jnp.float32, -bound, bound)
    b = 1e-4 * jax.random.normal(kb, (Cout,), jnp.float32)

    y = scale_aware_conv1d_alt(x, dx, w, b, ps)
    y = jax.block_until_ready(y)

    y_ref = reference(x, dx, w, b, ps)
    assert y.shape == (N, Cout, L), y.shape
    assert bool(jnp.all(jnp.isfinite(y)))
    max_err = float(jnp.max(jnp.abs(y - y_ref)))
    assert max_err < 1e-4, f"mismatch vs reference: {max_err}"
    print("KERNEL_OK")
</pallas_src>

<mosaic_0001>
module attributes {stable_mosaic.version = 11 : i64} {
  func.func @saconv_kernel(%arg0: i32, %arg1: memref<8x512xf32, #tpu.memory_space<vmem>>, %arg2: memref<96xf32, #tpu.memory_space<smem>>, %arg3: memref<8xf32, #tpu.memory_space<smem>>, %arg4: memref<8x1024xf32, #tpu.memory_space<vmem>>) attributes {dimension_semantics = [#tpu.dimension_semantics<parallel>], iteration_bounds = array<i64: 2>, scalar_prefetch = 0 : i64, scratch_operands = 0 : i64, tpu.core_type = #tpu.core_type<tc>, window_params = [{transform_indices = @transform_0, window_bounds = array<i64: 8, 512>}, {transform_indices = @transform_1, window_bounds = array<i64: 96>}, {transform_indices = @transform_2, window_bounds = array<i64: 8>}, {transform_indices = @transform_3, window_bounds = array<i64: 8, 1024>}]} {
    %c0 = arith.constant 0 : index
    %c0_0 = arith.constant 0 : index
    %0 = vector.load %arg1[%c0, %c0_0] : memref<8x512xf32, #tpu.memory_space<vmem>>, vector<8x128xf32>
    %c1_i32 = arith.constant 1 : i32
    %1 = tpu.dynamic_rotate %0 by %c1_i32 dim 1 : vector<8x128xf32>, i32 -> vector<8x128xf32>
    %c127_i32 = arith.constant 127 : i32
    %2 = tpu.dynamic_rotate %0 by %c127_i32 dim 1 : vector<8x128xf32>, i32 -> vector<8x128xf32>
    %c0_1 = arith.constant 0 : index
    %3 = memref.load %arg2[%c0_1] : memref<96xf32, #tpu.memory_space<smem>>
    %4 = vector.broadcast %3 : f32 to vector<8x128xf32>
    %5 = arith.mulf %4, %1 : vector<8x128xf32>
    %c1 = arith.constant 1 : index
    %6 = memref.load %arg2[%c1] : memref<96xf32, #tpu.memory_space<smem>>
    %7 = vector.broadcast %6 : f32 to vector<8x128xf32>
    %8 = arith.mulf %7, %0 : vector<8x128xf32>
    %9 = arith.addf %5, %8 : vector<8x128xf32>
    %c2 = arith.constant 2 : index
    %10 = memref.load %arg2[%c2] : memref<96xf32, #tpu.memory_space<smem>>
    %11 = vector.broadcast %10 : f32 to vector<8x128xf32>
    %12 = arith.mulf %11, %2 : vector<8x128xf32>
    %13 = arith.addf %9, %12 : vector<8x128xf32>
    %c12 = arith.constant 12 : index
    %14 = memref.load %arg2[%c12] : memref<96xf32, #tpu.memory_space<smem>>
    %15 = vector.broadcast %14 : f32 to vector<8x128xf32>
    %16 = arith.mulf %15, %1 : vector<8x128xf32>
    %c13 = arith.constant 13 : index
    %17 = memref.load %arg2[%c13] : memref<96xf32, #tpu.memory_space<smem>>
    %18 = vector.broadcast %17 : f32 to vector<8x128xf32>
    %19 = arith.mulf %18, %0 : vector<8x128xf32>
    %20 = arith.addf %16, %19 : vector<8x128xf32>
    %c14 = arith.constant 14 : index
    %21 = memref.load %arg2[%c14] : memref<96xf32, #tpu.memory_space<smem>>
    %22 = vector.broadcast %21 : f32 to vector<8x128xf32>
    %23 = arith.mulf %22, %2 : vector<8x128xf32>
    %24 = arith.addf %20, %23 : vector<8x128xf32>
    %c24 = arith.constant 24 : index
    %25 = memref.load %arg2[%c24] : memref<96xf32, #tpu.memory_space<smem>>
    %26 = vector.broadcast %25 : f32 to vector<8x128xf32>
    %27 = arith.mulf %26, %1 : vector<8x128xf32>
    %c25 = arith.constant 25 : index
    %28 = memref.load %arg2[%c25] : memref<96xf32, #tpu.memory_space<smem>>
    %29 = vector.broadcast %28 : f32 to vector<8x128xf32>
    %30 = arith.mulf %29, %0 : vector<8x128xf32>
    %31 = arith.addf %27, %30 : vector<8x128xf32>
    %c26 = arith.constant 26 : index
    %32 = memref.load %arg2[%c26] : memref<96xf32, #tpu.memory_space<smem>>
    %33 = vector.broadcast %32 : f32 to vector<8x128xf32>
    %34 = arith.mulf %33, %2 : vector<8x128xf32>
    %35 = arith.addf %31, %34 : vector<8x128xf32>
    %c36 = arith.constant 36 : index
    %36 = memref.load %arg2[%c36] : memref<96xf32, #tpu.memory_space<smem>>
    %37 = vector.broadcast %36 : f32 to vector<8x128xf32>
    %38 = arith.mulf %37, %1 : vector<8x128xf32>
    %c37 = arith.constant 37 : index
    %39 = memref.load %arg2[%c37] : memref<96xf32, #tpu.memory_space<smem>>
    %40 = vector.broadcast %39 : f32 to vector<8x128xf32>
    %41 = arith.mulf %40, %0 : vector<8x128xf32>
    %42 = arith.addf %38, %41 : vector<8x128xf32>
    %c38 = arith.constant 38 : index
    %43 = memref.load %arg2[%c38] : memref<96xf32, #tpu.memory_space<smem>>
    %44 = vector.broadcast %43 : f32 to vector<8x128xf32>
    %45 = arith.mulf %44, %2 : vector<8x128xf32>
    %46 = arith.addf %42, %45 : vector<8x128xf32>
    %c48 = arith.constant 48 : index
    %47 = memref.load %arg2[%c48] : memref<96xf32, #tpu.memory_space<smem>>
    %48 = vector.broadcast %47 : f32 to vector<8x128xf32>
    %49 = arith.mulf %48, %1 : vector<8x128xf32>
    %c49 = arith.constant 49 : index
    %50 = memref.load %arg2[%c49] : memref<96xf32, #tpu.memory_space<smem>>
    %51 = vector.broadcast %50 : f32 to vector<8x128xf32>
    %52 = arith.mulf %51, %0 : vector<8x128xf32>
    %53 = arith.addf %49, %52 : vector<8x128xf32>
    %c50 = arith.constant 50 : index
    %54 = memref.load %arg2[%c50] : memref<96xf32, #tpu.memory_space<smem>>
    %55 = vector.broadcast %54 : f32 to vector<8x128xf32>
    %56 = arith.mulf %55, %2 : vector<8x128xf32>
    %57 = arith.addf %53, %56 : vector<8x128xf32>
    %c60 = arith.constant 60 : index
    %58 = memref.load %arg2[%c60] : memref<96xf32, #tpu.memory_space<smem>>
    %59 = vector.broadcast %58 : f32 to vector<8x128xf32>
    %60 = arith.mulf %59, %1 : vector<8x128xf32>
    %c61 = arith.constant 61 : index
    %61 = memref.load %arg2[%c61] : memref<96xf32, #tpu.memory_space<smem>>
    %62 = vector.broadcast %61 : f32 to vector<8x128xf32>
    %63 = arith.mulf %62, %0 : vector<8x128xf32>
    %64 = arith.addf %60, %63 : vector<8x128xf32>
    %c62 = arith.constant 62 : index
    %65 = memref.load %arg2[%c62] : memref<96xf32, #tpu.memory_space<smem>>
    %66 = vector.broadcast %65 : f32 to vector<8x128xf32>
    %67 = arith.mulf %66, %2 : vector<8x128xf32>
    %68 = arith.addf %64, %67 : vector<8x128xf32>
    %c72 = arith.constant 72 : index
    %69 = memref.load %arg2[%c72] : memref<96xf32, #tpu.memory_space<smem>>
    %70 = vector.broadcast %69 : f32 to vector<8x128xf32>
    %71 = arith.mulf %70, %1 : vector<8x128xf32>
    %c73 = arith.constant 73 : index
    %72 = memref.load %arg2[%c73] : memref<96xf32, #tpu.memory_space<smem>>
    %73 = vector.broadcast %72 : f32 to vector<8x128xf32>
    %74 = arith.mulf %73, %0 : vector<8x128xf32>
    %75 = arith.addf %71, %74 : vector<8x128xf32>
    %c74 = arith.constant 74 : index
    %76 = memref.load %arg2[%c74] : memref<96xf32, #tpu.memory_space<smem>>
    %77 = vector.broadcast %76 : f32 to vector<8x128xf32>
    %78 = arith.mulf %77, %2 : vector<8x128xf32>
    %79 = arith.addf %75, %78 : vector<8x128xf32>
    %c84 = arith.constant 84 : index
    %80 = memref.load %arg2[%c84] : memref<96xf32, #tpu.memory_space<smem>>
    %81 = vector.broadcast %80 : f32 to vector<8x128xf32>
    %82 = arith.mulf %81, %1 : vector<8x128xf32>
    %c85 = arith.constant 85 : index
    %83 = memref.load %arg2[%c85] : memref<96xf32, #tpu.memory_space<smem>>
    %84 = vector.broadcast %83 : f32 to vector<8x128xf32>
    %85 = arith.mulf %84, %0 : vector<8x128xf32>
    %86 = arith.addf %82, %85 : vector<8x128xf32>
    %c86 = arith.constant 86 : index
    %87 = memref.load %arg2[%c86] : memref<96xf32, #tpu.memory_space<smem>>
    %88 = vector.broadcast %87 : f32 to vector<8x128xf32>
    %89 = arith.mulf %88, %2 : vector<8x128xf32>
    %90 = arith.addf %86, %89 : vector<8x128xf32>
    %c0_2 = arith.constant 0 : index
    %c128 = arith.constant 128 : index
    %91 = vector.load %arg1[%c0_2, %c128] : memref<8x512xf32, #tpu.memory_space<vmem>>, vector<8x128xf32>
    %c1_i32_3 = arith.constant 1 : i32
    %92 = tpu.dynamic_rotate %91 by %c1_i32_3 dim 1 : vector<8x128xf32>, i32 -> vector<8x128xf32>
    %c127_i32_4 = arith.constant 127 : i32
    %93 = tpu.dynamic_rotate %91 by %c127_i32_4 dim 1 : vector<8x128xf32>, i32 -> vector<8x128xf32>
    %c3 = arith.constant 3 : index
    %94 = memref.load %arg2[%c3] : memref<96xf32, #tpu.memory_space<smem>>
    %95 = vector.broadcast %94 : f32 to vector<8x128xf32>
    %96 = arith.mulf %95, %92 : vector<8x128xf32>
    %c4 = arith.constant 4 : index
    %97 = memref.load %arg2[%c4] : memref<96xf32, #tpu.memory_space<smem>>
    %98 = vector.broadcast %97 : f32 to vector<8x128xf32>
    %99 = arith.mulf %98, %91 : vector<8x128xf32>
    %100 = arith.addf %96, %99 : vector<8x128xf32>
    %c5 = arith.constant 5 : index
    %101 = memref.load %arg2[%c5] : memref<96xf32, #tpu.memory_space<smem>>
    %102 = vector.broadcast %101 : f32 to vector<8x128xf32>
    %103 = arith.mulf %102, %93 : vector<8x128xf32>
    %104 = arith.addf %100, %103 : vector<8x128xf32>
    %105 = arith.addf %13, %104 : vector<8x128xf32>
    %c15 = arith.constant 15 : index
    %106 = memref.load %arg2[%c15] : memref<96xf32, #tpu.memory_space<smem>>
    %107 = vector.broadcast %106 : f32 to vector<8x128xf32>
    %108 = arith.mulf %107, %92 : vector<8x128xf32>
    %c16 = arith.constant 16 : index
    %109 = memref.load %arg2[%c16] : memref<96xf32, #tpu.memory_space<smem>>
    %110 = vector.broadcast %109 : f32 to vector<8x128xf32>
    %111 = arith.mulf %110, %91 : vector<8x128xf32>
    %112 = arith.addf %108, %111 : vector<8x128xf32>
    %c17 = arith.constant 17 : index
    %113 = memref.load %arg2[%c17] : memref<96xf32, #tpu.memory_space<smem>>
    %114 = vector.broadcast %113 : f32 to vector<8x128xf32>
    %115 = arith.mulf %114, %93 : vector<8x128xf32>
    %116 = arith.addf %112, %115 : vector<8x128xf32>
    %117 = arith.addf %24, %116 : vector<8x128xf32>
    %c27 = arith.constant 27 : index
    %118 = memref.load %arg2[%c27] : memref<96xf32, #tpu.memory_space<smem>>
    %119 = vector.broadcast %118 : f32 to vector<8x128xf32>
    %120 = arith.mulf %119, %92 : vector<8x128xf32>
    %c28 = arith.constant 28 : index
    %121 = memref.load %arg2[%c28] : memref<96xf32, #tpu.memory_space<smem>>
    %122 = vector.broadcast %121 : f32 to vector<8x128xf32>
    %123 = arith.mulf %122, %91 : vector<8x128xf32>
    %124 = arith.addf %120, %123 : vector<8x128xf32>
    %c29 = arith.constant 29 : index
    %125 = memref.load %arg2[%c29] : memref<96xf32, #tpu.memory_space<smem>>
    %126 = vector.broadcast %125 : f32 to vector<8x128xf32>
    %127 = arith.mulf %126, %93 : vector<8x128xf32>
    %128 = arith.addf %124, %127 : vector<8x128xf32>
    %129 = arith.addf %35, %128 : vector<8x128xf32>
    %c39 = arith.constant 39 : index
    %130 = memref.load %arg2[%c39] : memref<96xf32, #tpu.memory_space<smem>>
    %131 = vector.broadcast %130 : f32 to vector<8x128xf32>
    %132 = arith.mulf %131, %92 : vector<8x128xf32>
    %c40 = arith.constant 40 : index
    %133 = memref.load %arg2[%c40] : memref<96xf32, #tpu.memory_space<smem>>
    %134 = vector.broadcast %133 : f32 to vector<8x128xf32>
    %135 = arith.mulf %134, %91 : vector<8x128xf32>
    %136 = arith.addf %132, %135 : vector<8x128xf32>
    %c41 = arith.constant 41 : index
    %137 = memref.load %arg2[%c41] : memref<96xf32, #tpu.memory_space<smem>>
    %138 = vector.broadcast %137 : f32 to vector<8x128xf32>
    %139 = arith.mulf %138, %93 : vector<8x128xf32>
    %140 = arith.addf %136, %139 : vector<8x128xf32>
    %141 = arith.addf %46, %140 : vector<8x128xf32>
    %c51 = arith.constant 51 : index
    %142 = memref.load %arg2[%c51] : memref<96xf32, #tpu.memory_space<smem>>
    %143 = vector.broadcast %142 : f32 to vector<8x128xf32>
    %144 = arith.mulf %143, %92 : vector<8x128xf32>
    %c52 = arith.constant 52 : index
    %145 = memref.load %arg2[%c52] : memref<96xf32, #tpu.memory_space<smem>>
    %146 = vector.broadcast %145 : f32 to vector<8x128xf32>
    %147 = arith.mulf %146, %91 : vector<8x128xf32>
    %148 = arith.addf %144, %147 : vector<8x128xf32>
    %c53 = arith.constant 53 : index
    %149 = memref.load %arg2[%c53] : memref<96xf32, #tpu.memory_space<smem>>
    %150 = vector.broadcast %149 : f32 to vector<8x128xf32>
    %151 = arith.mulf %150, %93 : vector<8x128xf32>
    %152 = arith.addf %148, %151 : vector<8x128xf32>
    %153 = arith.addf %57, %152 : vector<8x128xf32>
    %c63 = arith.constant 63 : index
    %154 = memref.load %arg2[%c63] : memref<96xf32, #tpu.memory_space<smem>>
    %155 = vector.broadcast %154 : f32 to vector<8x128xf32>
    %156 = arith.mulf %155, %92 : vector<8x128xf32>
    %c64 = arith.constant 64 : index
    %157 = memref.load %arg2[%c64] : memref<96xf32, #tpu.memory_space<smem>>
    %158 = vector.broadcast %157 : f32 to vector<8x128xf32>
    %159 = arith.mulf %158, %91 : vector<8x128xf32>
    %160 = arith.addf %156, %159 : vector<8x128xf32>
    %c65 = arith.constant 65 : index
    %161 = memref.load %arg2[%c65] : memref<96xf32, #tpu.memory_space<smem>>
    %162 = vector.broadcast %161 : f32 to vector<8x128xf32>
    %163 = arith.mulf %162, %93 : vector<8x128xf32>
    %164 = arith.addf %160, %163 : vector<8x128xf32>
    %165 = arith.addf %68, %164 : vector<8x128xf32>
    %c75 = arith.constant 75 : index
    %166 = memref.load %arg2[%c75] : memref<96xf32, #tpu.memory_space<smem>>
    %167 = vector.broadcast %166 : f32 to vector<8x128xf32>
    %168 = arith.mulf %167, %92 : vector<8x128xf32>
    %c76 = arith.constant 76 : index
    %169 = memref.load %arg2[%c76] : memref<96xf32, #tpu.memory_space<smem>>
    %170 = vector.broadcast %169 : f32 to vector<8x128xf32>
    %171 = arith.mulf %170, %91 : vector<8x128xf32>
    %172 = arith.addf %168, %171 : vector<8x128xf32>
    %c77 = arith.constant 77 : index
    %173 = memref.load %arg2[%c77] : memref<96xf32, #tpu.memory_space<smem>>
    %174 = vector.broadcast %173 : f32 to vector<8x128xf32>
    %175 = arith.mulf %174, %93 : vector<8x128xf32>
    %176 = arith.addf %172, %175 : vector<8x128xf32>
    %177 = arith.addf %79, %176 : vector<8x128xf32>
    %c87 = arith.constant 87 : index
    %178 = memref.load %arg2[%c87] : memref<96xf32, #tpu.memory_space<smem>>
    %179 = vector.broadcast %178 : f32 to vector<8x128xf32>
    %180 = arith.mulf %179, %92 : vector<8x128xf32>
    %c88 = arith.constant 88 : index
    %181 = memref.load %arg2[%c88] : memref<96xf32, #tpu.memory_space<smem>>
    %182 = vector.broadcast %181 : f32 to vector<8x128xf32>
    %183 = arith.mulf %182, %91 : vector<8x128xf32>
    %184 = arith.addf %180, %183 : vector<8x128xf32>
    %c89 = arith.constant 89 : index
    %185 = memref.load %arg2[%c89] : memref<96xf32, #tpu.memory_space<smem>>
    %186 = vector.broadcast %185 : f32 to vector<8x128xf32>
    %187 = arith.mulf %186, %93 : vector<8x128xf32>
    %188 = arith.addf %184, %187 : vector<8x128xf32>
    %189 = arith.addf %90, %188 : vector<8x128xf32>
    %c0_5 = arith.constant 0 : index
    %c256 = arith.constant 256 : index
    %190 = vector.load %arg1[%c0_5, %c256] : memref<8x512xf32, #tpu.memory_space<vmem>>, vector<8x128xf32>
    %c1_i32_6 = arith.constant 1 : i32
    %191 = tpu.dynamic_rotate %190 by %c1_i32_6 dim 1 : vector<8x128xf32>, i32 -> vector<8x128xf32>
    %c127_i32_7 = arith.constant 127 : i32
    %192 = tpu.dynamic_rotate %190 by %c127_i32_7 dim 1 : vector<8x128xf32>, i32 -> vector<8x128xf32>
    %c6 = arith.constant 6 : index
    %193 = memref.load %arg2[%c6] : memref<96xf32, #tpu.memory_space<smem>>
    %194 = vector.broadcast %193 : f32 to vector<8x128xf32>
    %195 = arith.mulf %194, %191 : vector<8x128xf32>
    %c7 = arith.constant 7 : index
    %196 = memref.load %arg2[%c7] : memref<96xf32, #tpu.memory_space<smem>>
    %197 = vector.broadcast %196 : f32 to vector<8x128xf32>
    %198 = arith.mulf %197, %190 : vector<8x128xf32>
    %199 = arith.addf %195, %198 : vector<8x128xf32>
    %c8 = arith.constant 8 : index
    %200 = memref.load %arg2[%c8] : memref<96xf32, #tpu.memory_space<smem>>
    %201 = vector.broadcast %200 : f32 to vector<8x128xf32>
    %202 = arith.mulf %201, %192 : vector<8x128xf32>
    %203 = arith.addf %199, %202 : vector<8x128xf32>
    %204 = arith.addf %105, %203 : vector<8x128xf32>
    %c18 = arith.constant 18 : index
    %205 = memref.load %arg2[%c18] : memref<96xf32, #tpu.memory_space<smem>>
    %206 = vector.broadcast %205 : f32 to vector<8x128xf32>
    %207 = arith.mulf %206, %191 : vector<8x128xf32>
    %c19 = arith.constant 19 : index
    %208 = memref.load %arg2[%c19] : memref<96xf32, #tpu.memory_space<smem>>
    %209 = vector.broadcast %208 : f32 to vector<8x128xf32>
    %210 = arith.mulf %209, %190 : vector<8x128xf32>
    %211 = arith.addf %207, %210 : vector<8x128xf32>
    %c20 = arith.constant 20 : index
    %212 = memref.load %arg2[%c20] : memref<96xf32, #tpu.memory_space<smem>>
    %213 = vector.broadcast %212 : f32 to vector<8x128xf32>
    %214 = arith.mulf %213, %192 : vector<8x128xf32>
    %215 = arith.addf %211, %214 : vector<8x128xf32>
    %216 = arith.addf %117, %215 : vector<8x128xf32>
    %c30 = arith.constant 30 : index
    %217 = memref.load %arg2[%c30] : memref<96xf32, #tpu.memory_space<smem>>
    %218 = vector.broadcast %217 : f32 to vector<8x128xf32>
    %219 = arith.mulf %218, %191 : vector<8x128xf32>
    %c31 = arith.constant 31 : index
    %220 = memref.load %arg2[%c31] : memref<96xf32, #tpu.memory_space<smem>>
    %221 = vector.broadcast %220 : f32 to vector<8x128xf32>
    %222 = arith.mulf %221, %190 : vector<8x128xf32>
    %223 = arith.addf %219, %222 : vector<8x128xf32>
    %c32 = arith.constant 32 : index
    %224 = memref.load %arg2[%c32] : memref<96xf32, #tpu.memory_space<smem>>
    %225 = vector.broadcast %224 : f32 to vector<8x128xf32>
    %226 = arith.mulf %225, %192 : vector<8x128xf32>
    %227 = arith.addf %223, %226 : vector<8x128xf32>
    %228 = arith.addf %129, %227 : vector<8x128xf32>
    %c42 = arith.constant 42 : index
    %229 = memref.load %arg2[%c42] : memref<96xf32, #tpu.memory_space<smem>>
    %230 = vector.broadcast %229 : f32 to vector<8x128xf32>
    %231 = arith.mulf %230, %191 : vector<8x128xf32>
    %c43 = arith.constant 43 : index
    %232 = memref.load %arg2[%c43] : memref<96xf32, #tpu.memory_space<smem>>
    %233 = vector.broadcast %232 : f32 to vector<8x128xf32>
    %234 = arith.mulf %233, %190 : vector<8x128xf32>
    %235 = arith.addf %231, %234 : vector<8x128xf32>
    %c44 = arith.constant 44 : index
    %236 = memref.load %arg2[%c44] : memref<96xf32, #tpu.memory_space<smem>>
    %237 = vector.broadcast %236 : f32 to vector<8x128xf32>
    %238 = arith.mulf %237, %192 : vector<8x128xf32>
    %239 = arith.addf %235, %238 : vector<8x128xf32>
    %240 = arith.addf %141, %239 : vector<8x128xf32>
    %c54 = arith.constant 54 : index
    %241 = memref.load %arg2[%c54] : memref<96xf32, #tpu.memory_space<smem>>
    %242 = vector.broadcast %241 : f32 to vector<8x128xf32>
    %243 = arith.mulf %242, %191 : vector<8x128xf32>
    %c55 = arith.constant 55 : index
    %244 = memref.load %arg2[%c55] : memref<96xf32, #tpu.memory_space<smem>>
    %245 = vector.broadcast %244 : f32 to vector<8x128xf32>
    %246 = arith.mulf %245, %190 : vector<8x128xf32>
    %247 = arith.addf %243, %246 : vector<8x128xf32>
    %c56 = arith.constant 56 : index
    %248 = memref.load %arg2[%c56] : memref<96xf32, #tpu.memory_space<smem>>
    %249 = vector.broadcast %248 : f32 to vector<8x128xf32>
    %250 = arith.mulf %249, %192 : vector<8x128xf32>
    %251 = arith.addf %247, %250 : vector<8x128xf32>
    %252 = arith.addf %153, %251 : vector<8x128xf32>
    %c66 = arith.constant 66 : index
    %253 = memref.load %arg2[%c66] : memref<96xf32, #tpu.memory_space<smem>>
    %254 = vector.broadcast %253 : f32 to vector<8x128xf32>
    %255 = arith.mulf %254, %191 : vector<8x128xf32>
    %c67 = arith.constant 67 : index
    %256 = memref.load %arg2[%c67] : memref<96xf32, #tpu.memory_space<smem>>
    %257 = vector.broadcast %256 : f32 to vector<8x128xf32>
    %258 = arith.mulf %257, %190 : vector<8x128xf32>
    %259 = arith.addf %255, %258 : vector<8x128xf32>
    %c68 = arith.constant 68 : index
    %260 = memref.load %arg2[%c68] : memref<96xf32, #tpu.memory_space<smem>>
    %261 = vector.broadcast %260 : f32 to vector<8x128xf32>
    %262 = arith.mulf %261, %192 : vector<8x128xf32>
    %263 = arith.addf %259, %262 : vector<8x128xf32>
    %264 = arith.addf %165, %263 : vector<8x128xf32>
    %c78 = arith.constant 78 : index
    %265 = memref.load %arg2[%c78] : memref<96xf32, #tpu.memory_space<smem>>
    %266 = vector.broadcast %265 : f32 to vector<8x128xf32>
    %267 = arith.mulf %266, %191 : vector<8x128xf32>
    %c79 = arith.constant 79 : index
    %268 = memref.load %arg2[%c79] : memref<96xf32, #tpu.memory_space<smem>>
    %269 = vector.broadcast %268 : f32 to vector<8x128xf32>
    %270 = arith.mulf %269, %190 : vector<8x128xf32>
    %271 = arith.addf %267, %270 : vector<8x128xf32>
    %c80 = arith.constant 80 : index
    %272 = memref.load %arg2[%c80] : memref<96xf32, #tpu.memory_space<smem>>
    %273 = vector.broadcast %272 : f32 to vector<8x128xf32>
    %274 = arith.mulf %273, %192 : vector<8x128xf32>
    %275 = arith.addf %271, %274 : vector<8x128xf32>
    %276 = arith.addf %177, %275 : vector<8x128xf32>
    %c90 = arith.constant 90 : index
    %277 = memref.load %arg2[%c90] : memref<96xf32, #tpu.memory_space<smem>>
    %278 = vector.broadcast %277 : f32 to vector<8x128xf32>
    %279 = arith.mulf %278, %191 : vector<8x128xf32>
    %c91 = arith.constant 91 : index
    %280 = memref.load %arg2[%c91] : memref<96xf32, #tpu.memory_space<smem>>
    %281 = vector.broadcast %280 : f32 to vector<8x128xf32>
    %282 = arith.mulf %281, %190 : vector<8x128xf32>
    %283 = arith.addf %279, %282 : vector<8x128xf32>
    %c92 = arith.constant 92 : index
    %284 = memref.load %arg2[%c92] : memref<96xf32, #tpu.memory_space<smem>>
    %285 = vector.broadcast %284 : f32 to vector<8x128xf32>
    %286 = arith.mulf %285, %192 : vector<8x128xf32>
    %287 = arith.addf %283, %286 : vector<8x128xf32>
    %288 = arith.addf %189, %287 : vector<8x128xf32>
    %c0_8 = arith.constant 0 : index
    %c384 = arith.constant 384 : index
    %289 = vector.load %arg1[%c0_8, %c384] : memref<8x512xf32, #tpu.memory_space<vmem>>, vector<8x128xf32>
    %c1_i32_9 = arith.constant 1 : i32
    %290 = tpu.dynamic_rotate %289 by %c1_i32_9 dim 1 : vector<8x128xf32>, i32 -> vector<8x128xf32>
    %c127_i32_10 = arith.constant 127 : i32
    %291 = tpu.dynamic_rotate %289 by %c127_i32_10 dim 1 : vector<8x128xf32>, i32 -> vector<8x128xf32>
    %c9 = arith.constant 9 : index
    %292 = memref.load %arg2[%c9] : memref<96xf32, #tpu.memory_space<smem>>
    %293 = vector.broadcast %292 : f32 to vector<8x128xf32>
    %294 = arith.mulf %293, %290 : vector<8x128xf32>
    %c10 = arith.constant 10 : index
    %295 = memref.load %arg2[%c10] : memref<96xf32, #tpu.memory_space<smem>>
    %296 = vector.broadcast %295 : f32 to vector<8x128xf32>
    %297 = arith.mulf %296, %289 : vector<8x128xf32>
    %298 = arith.addf %294, %297 : vector<8x128xf32>
    %c11 = arith.constant 11 : index
    %299 = memref.load %arg2[%c11] : memref<96xf32, #tpu.memory_space<smem>>
    %300 = vector.broadcast %299 : f32 to vector<8x128xf32>
    %301 = arith.mulf %300, %291 : vector<8x128xf32>
    %302 = arith.addf %298, %301 : vector<8x128xf32>
    %303 = arith.addf %204, %302 : vector<8x128xf32>
    %c21 = arith.constant 21 : index
    %304 = memref.load %arg2[%c21] : memref<96xf32, #tpu.memory_space<smem>>
    %305 = vector.broadcast %304 : f32 to vector<8x128xf32>
    %306 = arith.mulf %305, %290 : vector<8x128xf32>
    %c22 = arith.constant 22 : index
    %307 = memref.load %arg2[%c22] : memref<96xf32, #tpu.memory_space<smem>>
    %308 = vector.broadcast %307 : f32 to vector<8x128xf32>
    %309 = arith.mulf %308, %289 : vector<8x128xf32>
    %310 = arith.addf %306, %309 : vector<8x128xf32>
    %c23 = arith.constant 23 : index
    %311 = memref.load %arg2[%c23] : memref<96xf32, #tpu.memory_space<smem>>
    %312 = vector.broadcast %311 : f32 to vector<8x128xf32>
    %313 = arith.mulf %312, %291 : vector<8x128xf32>
    %314 = arith.addf %310, %313 : vector<8x128xf32>
    %315 = arith.addf %216, %314 : vector<8x128xf32>
    %c33 = arith.constant 33 : index
    %316 = memref.load %arg2[%c33] : memref<96xf32, #tpu.memory_space<smem>>
    %317 = vector.broadcast %316 : f32 to vector<8x128xf32>
    %318 = arith.mulf %317, %290 : vector<8x128xf32>
    %c34 = arith.constant 34 : index
    %319 = memref.load %arg2[%c34] : memref<96xf32, #tpu.memory_space<smem>>
    %320 = vector.broadcast %319 : f32 to vector<8x128xf32>
    %321 = arith.mulf %320, %289 : vector<8x128xf32>
    %322 = arith.addf %318, %321 : vector<8x128xf32>
    %c35 = arith.constant 35 : index
    %323 = memref.load %arg2[%c35] : memref<96xf32, #tpu.memory_space<smem>>
    %324 = vector.broadcast %323 : f32 to vector<8x128xf32>
    %325 = arith.mulf %324, %291 : vector<8x128xf32>
    %326 = arith.addf %322, %325 : vector<8x128xf32>
    %327 = arith.addf %228, %326 : vector<8x128xf32>
    %c45 = arith.constant 45 : index
    %328 = memref.load %arg2[%c45] : memref<96xf32, #tpu.memory_space<smem>>
    %329 = vector.broadcast %328 : f32 to vector<8x128xf32>
    %330 = arith.mulf %329, %290 : vector<8x128xf32>
    %c46 = arith.constant 46 : index
    %331 = memref.load %arg2[%c46] : memref<96xf32, #tpu.memory_space<smem>>
    %332 = vector.broadcast %331 : f32 to vector<8x128xf32>
    %333 = arith.mulf %332, %289 : vector<8x128xf32>
    %334 = arith.addf %330, %333 : vector<8x128xf32>
    %c47 = arith.constant 47 : index
    %335 = memref.load %arg2[%c47] : memref<96xf32, #tpu.memory_space<smem>>
    %336 = vector.broadcast %335 : f32 to vector<8x128xf32>
    %337 = arith.mulf %336, %291 : vector<8x128xf32>
    %338 = arith.addf %334, %337 : vector<8x128xf32>
    %339 = arith.addf %240, %338 : vector<8x128xf32>
    %c57 = arith.constant 57 : index
    %340 = memref.load %arg2[%c57] : memref<96xf32, #tpu.memory_space<smem>>
    %341 = vector.broadcast %340 : f32 to vector<8x128xf32>
    %342 = arith.mulf %341, %290 : vector<8x128xf32>
    %c58 = arith.constant 58 : index
    %343 = memref.load %arg2[%c58] : memref<96xf32, #tpu.memory_space<smem>>
    %344 = vector.broadcast %343 : f32 to vector<8x128xf32>
    %345 = arith.mulf %344, %289 : vector<8x128xf32>
    %346 = arith.addf %342, %345 : vector<8x128xf32>
    %c59 = arith.constant 59 : index
    %347 = memref.load %arg2[%c59] : memref<96xf32, #tpu.memory_space<smem>>
    %348 = vector.broadcast %347 : f32 to vector<8x128xf32>
    %349 = arith.mulf %348, %291 : vector<8x128xf32>
    %350 = arith.addf %346, %349 : vector<8x128xf32>
    %351 = arith.addf %252, %350 : vector<8x128xf32>
    %c69 = arith.constant 69 : index
    %352 = memref.load %arg2[%c69] : memref<96xf32, #tpu.memory_space<smem>>
    %353 = vector.broadcast %352 : f32 to vector<8x128xf32>
    %354 = arith.mulf %353, %290 : vector<8x128xf32>
    %c70 = arith.constant 70 : index
    %355 = memref.load %arg2[%c70] : memref<96xf32, #tpu.memory_space<smem>>
    %356 = vector.broadcast %355 : f32 to vector<8x128xf32>
    %357 = arith.mulf %356, %289 : vector<8x128xf32>
    %358 = arith.addf %354, %357 : vector<8x128xf32>
    %c71 = arith.constant 71 : index
    %359 = memref.load %arg2[%c71] : memref<96xf32, #tpu.memory_space<smem>>
    %360 = vector.broadcast %359 : f32 to vector<8x128xf32>
    %361 = arith.mulf %360, %291 : vector<8x128xf32>
    %362 = arith.addf %358, %361 : vector<8x128xf32>
    %363 = arith.addf %264, %362 : vector<8x128xf32>
    %c81 = arith.constant 81 : index
    %364 = memref.load %arg2[%c81] : memref<96xf32, #tpu.memory_space<smem>>
    %365 = vector.broadcast %364 : f32 to vector<8x128xf32>
    %366 = arith.mulf %365, %290 : vector<8x128xf32>
    %c82 = arith.constant 82 : index
    %367 = memref.load %arg2[%c82] : memref<96xf32, #tpu.memory_space<smem>>
    %368 = vector.broadcast %367 : f32 to vector<8x128xf32>
    %369 = arith.mulf %368, %289 : vector<8x128xf32>
    %370 = arith.addf %366, %369 : vector<8x128xf32>
    %c83 = arith.constant 83 : index
    %371 = memref.load %arg2[%c83] : memref<96xf32, #tpu.memory_space<smem>>
    %372 = vector.broadcast %371 : f32 to vector<8x128xf32>
    %373 = arith.mulf %372, %291 : vector<8x128xf32>
    %374 = arith.addf %370, %373 : vector<8x128xf32>
    %375 = arith.addf %276, %374 : vector<8x128xf32>
    %c93 = arith.constant 93 : index
    %376 = memref.load %arg2[%c93] : memref<96xf32, #tpu.memory_space<smem>>
    %377 = vector.broadcast %376 : f32 to vector<8x128xf32>
    %378 = arith.mulf %377, %290 : vector<8x128xf32>
    %c94 = arith.constant 94 : index
    %379 = memref.load %arg2[%c94] : memref<96xf32, #tpu.memory_space<smem>>
    %380 = vector.broadcast %379 : f32 to vector<8x128xf32>
    %381 = arith.mulf %380, %289 : vector<8x128xf32>
    %382 = arith.addf %378, %381 : vector<8x128xf32>
    %c95 = arith.constant 95 : index
    %383 = memref.load %arg2[%c95] : memref<96xf32, #tpu.memory_space<smem>>
    %384 = vector.broadcast %383 : f32 to vector<8x128xf32>
    %385 = arith.mulf %384, %291 : vector<8x128xf32>
    %386 = arith.addf %382, %385 : vector<8x128xf32>
    %387 = arith.addf %288, %386 : vector<8x128xf32>
    %c0_11 = arith.constant 0 : index
    %388 = memref.load %arg3[%c0_11] : memref<8xf32, #tpu.memory_space<smem>>
    %389 = vector.broadcast %388 : f32 to vector<8x128xf32>
    %390 = arith.addf %303, %389 : vector<8x128xf32>
    %c0_12 = arith.constant 0 : index
    %c0_13 = arith.constant 0 : index
    %391 = vector.load %arg4[%c0_12, %c0_13] : memref<8x1024xf32, #tpu.memory_space<vmem>>, vector<8x128xf32>
    tpu.vector_store %arg4[%c0_12, %c0_13], %390 {strides = array<i32>} : memref<8x1024xf32, #tpu.memory_space<vmem>>, vector<8x128xf32>,
    %c1_14 = arith.constant 1 : index
    %392 = memref.load %arg3[%c1_14] : memref<8xf32, #tpu.memory_space<smem>>
    %393 = vector.broadcast %392 : f32 to vector<8x128xf32>
    %394 = arith.addf %315, %393 : vector<8x128xf32>
    %c0_15 = arith.constant 0 : index
    %c128_16 = arith.constant 128 : index
    %395 = vector.load %arg4[%c0_15, %c128_16] : memref<8x1024xf32, #tpu.memory_space<vmem>>, vector<8x128xf32>
    tpu.vector_store %arg4[%c0_15, %c128_16], %394 {strides = array<i32>} : memref<8x1024xf32, #tpu.memory_space<vmem>>, vector<8x128xf32>,
    %c2_17 = arith.constant 2 : index
    %396 = memref.load %arg3[%c2_17] : memref<8xf32, #tpu.memory_space<smem>>
    %397 = vector.broadcast %396 : f32 to vector<8x128xf32>
    %398 = arith.addf %327, %397 : vector<8x128xf32>
    %c0_18 = arith.constant 0 : index
    %c256_19 = arith.constant 256 : index
    %399 = vector.load %arg4[%c0_18, %c256_19] : memref<8x1024xf32, #tpu.memory_space<vmem>>, vector<8x128xf32>
    tpu.vector_store %arg4[%c0_18, %c256_19], %398 {strides = array<i32>} : memref<8x1024xf32, #tpu.memory_space<vmem>>, vector<8x128xf32>,
    %c3_20 = arith.constant 3 : index
    %400 = memref.load %arg3[%c3_20] : memref<8xf32, #tpu.memory_space<smem>>
    %401 = vector.broadcast %400 : f32 to vector<8x128xf32>
    %402 = arith.addf %339, %401 : vector<8x128xf32>
    %c0_21 = arith.constant 0 : index
    %c384_22 = arith.constant 384 : index
    %403 = vector.load %arg4[%c0_21, %c384_22] : memref<8x1024xf32, #tpu.memory_space<vmem>>, vector<8x128xf32>
    tpu.vector_store %arg4[%c0_21, %c384_22], %402 {strides = array<i32>} : memref<8x1024xf32, #tpu.memory_space<vmem>>, vector<8x128xf32>,
    %c4_23 = arith.constant 4 : index
    %404 = memref.load %arg3[%c4_23] : memref<8xf32, #tpu.memory_space<smem>>
    %405 = vector.broadcast %404 : f32 to vector<8x128xf32>
    %406 = arith.addf %351, %405 : vector<8x128xf32>
    %c0_24 = arith.constant 0 : index
    %c512 = arith.constant 512 : index
    %407 = vector.load %arg4[%c0_24, %c512] : memref<8x1024xf32, #tpu.memory_space<vmem>>, vector<8x128xf32>
    tpu.vector_store %arg4[%c0_24, %c512], %406 {strides = array<i32>} : memref<8x1024xf32, #tpu.memory_space<vmem>>, vector<8x128xf32>,
    %c5_25 = arith.constant 5 : index
    %408 = memref.load %arg3[%c5_25] : memref<8xf32, #tpu.memory_space<smem>>
    %409 = vector.broadcast %408 : f32 to vector<8x128xf32>
    %410 = arith.addf %363, %409 : vector<8x128xf32>
    %c0_26 = arith.constant 0 : index
    %c640 = arith.constant 640 : index
    %411 = vector.load %arg4[%c0_26, %c640] : memref<8x1024xf32, #tpu.memory_space<vmem>>, vector<8x128xf32>
    tpu.vector_store %arg4[%c0_26, %c640], %410 {strides = array<i32>} : memref<8x1024xf32, #tpu.memory_space<vmem>>, vector<8x128xf32>,
    %c6_27 = arith.constant 6 : index
    %412 = memref.load %arg3[%c6_27] : memref<8xf32, #tpu.memory_space<smem>>
    %413 = vector.broadcast %412 : f32 to vector<8x128xf32>
    %414 = arith.addf %375, %413 : vector<8x128xf32>
    %c0_28 = arith.constant 0 : index
    %c768 = arith.constant 768 : index
    %415 = vector.load %arg4[%c0_28, %c768] : memref<8x1024xf32, #tpu.memory_space<vmem>>, vector<8x128xf32>
    tpu.vector_store %arg4[%c0_28, %c768], %414 {strides = array<i32>} : memref<8x1024xf32, #tpu.memory_space<vmem>>, vector<8x128xf32>,
    %c7_29 = arith.constant 7 : index
    %416 = memref.load %arg3[%c7_29] : memref<8xf32, #tpu.memory_space<smem>>
    %417 = vector.broadcast %416 : f32 to vector<8x128xf32>
    %418 = arith.addf %387, %417 : vector<8x128xf32>
    %c0_30 = arith.constant 0 : index
    %c896 = arith.constant 896 : index
    %419 = vector.load %arg4[%c0_30, %c896] : memref<8x1024xf32, #tpu.memory_space<vmem>>, vector<8x128xf32>
    tpu.vector_store %arg4[%c0_30, %c896], %418 {strides = array<i32>} : memref<8x1024xf32, #tpu.memory_space<vmem>>, vector<8x128xf32>,
    return
  }
  func.func @transform_0(%arg0: i32) -> (i32, i32) {
    %c0_i32 = arith.constant 0 : i32
    %c0_i32_0 = arith.constant 0 : i32
    return %arg0, %c0_i32 : i32, i32
  }
  func.func @transform_1(%arg0: i32) -> i32 {
    %c0_i32 = arith.constant 0 : i32
    %c0_i32_0 = arith.constant 0 : i32
    return %c0_i32 : i32
  }
  func.func @transform_2(%arg0: i32) -> i32 {
    %c0_i32 = arith.constant 0 : i32
    %c0_i32_0 = arith.constant 0 : i32
    return %c0_i32 : i32
  }
  func.func @transform_3(%arg0: i32) -> (i32, i32) {
    %c0_i32 = arith.constant 0 : i32
    %c0_i32_0 = arith.constant 0 : i32
    return %arg0, %c0_i32 : i32, i32
  }
}

</mosaic_0001>

<llo_original>
// kernel: tpu_custom_call.1
$region0: #{tpu_custom_call.1}
  #allocation0 [shape = 'u32[]', space=smem, size = 0x4, offset = 0x4, fixed_abs, tag = 'smem constant byte address 0x4 - core index']
  #allocation1 [shape = 'u32[144,128]{1,0:T(1,128)}', space=vmem, size = 0x12000, scoped, tag = 'internal scratch']
  %s0 = inlined_call_operand.hbm [shape: f32[16,512], index: 0, kind: input, shape index: {}]
  %s1 = inlined_call_operand.vmem [shape: f32[96], index: 1, kind: input, shape index: {}]
  %s2 = inlined_call_operand.vmem [shape: f32[8], index: 2, kind: input, shape index: {}]
  %s3 = inlined_call_operand.hbm [shape: f32[16,1024], index: 3, kind: output, shape index: {}]
  %s4 = sld [smem:[#allocation0]]
  $region57: #{tpu_custom_call.1} parent=0
    _
  %s6 = ssub.s32 1, %s4
  %s7 = scalar_select 0, %s6, %s4
  $region1: #{tpu_custom_call.1} parent=0
    #allocation2 [shape = 'u8[32768]{0}', space=vmem, size = 0x8000, scoped, tag = 'input window, operand 0']
    #allocation3 [shape = 's32[2]{0}', space=sflag, size = 0x8, scoped, tag = 'scoped memory for tpu_custom_call.1']
    #allocation4 [shape = 's32[2]{0}', space=sflag, size = 0x8, scoped, tag = 'scoped memory for tpu_custom_call.1']
    #allocation5 [shape = 's32[2]{0}', space=sflag, size = 0x8, scoped, tag = 'scoped memory for tpu_custom_call.1']
    #allocation6 [shape = 'u8[512]{0}', space=smem, size = 0x200, scoped, tag = 'input window, operand 1, single buffered']
    #allocation7 [shape = 'u8[512]{0}', space=smem, size = 0x200, scoped, tag = 'input window, operand 2, single buffered']
    #allocation8 [shape = 's32[1]{0}', space=sflag, size = 0x4, scoped, tag = 'scoped memory for tpu_custom_call.1']
    #allocation9 [shape = 'u8[65536]{0}', space=vmem, size = 0x10000, scoped, tag = 'output window, operand 0']
    %8 = vsyncpa [#allocation3], 0
    %s9 = scalar_lea.sflag [#allocation3], 1
    %10 = vsyncpa %s9, 0
    %11 = vsyncpa [#allocation5], 0
    %12 = vsyncpa [#allocation8], 0
    %13 = vsyncpa [#allocation4], 0
    %s14 = scalar_lea.sflag [#allocation4], 1
    %15 = vsyncpa %s14, 0
    loop: start=0, step=1, limit=4
    $region2: #{tpu_custom_call.1} parent=1 // loop_pre_header
      _
    $region3: #{tpu_custom_call.1} parent=1 // loop_header
      %s17 = sphi 0, %s21
      %p18 = scmp.ge.s32.totalorder %s17, 4
      %s27 = sphi 0, %s29
      %s30 = sphi 0, %s27
      %s31 = sphi 0, %s30
      %s47 = sphi 0, %s31
      %s51 = sphi 0, %s51
      %s53 = sphi 0, %s51
      %s54 = sphi 0, %s53
      %s68 = sphi 0, %s54
      %s72 = sphi 0, %s72
      %s74 = sphi 0, %s72
      %s75 = sphi 0, %s74
      %s89 = sphi 0, %s75
      %s95 = sphi 0, %s97
      %s98 = sphi 0, %s95
      %s99 = sphi 0, %s98
      %s115 = sphi 0, %s99
    $region4: #{tpu_custom_call.1} parent=1 // loop_header_branch
      %20 = sbr.rel (%p18) target = $region8
    $region5: #{tpu_custom_call.1} parent=1 // loop_body
      %s22 = ssub.s32 %s17, 1
      %s23 = ssub.s32 %s17, 2
      %s24 = sadd.s32 %s17, 1
      %s25 = ssub.s32 %s17, %s24
      %p26 = scmp.eq.s32.totalorder %s25, 0
      %s28 = sadd.s32 %s27, 1
      %s29 = scalar_select %p26, %s27, %s28
      %p32 = pneg %p26
      %p33 = scmp.eq.s32.totalorder %s17, 1
      %p34 = por %p32, %p33
      %p35 = scmp.ne.s32.totalorder %s27, %s30
      %p36 = scmp.eq.s32.totalorder %s17, 0
      %p37 = por %p35, %p36
      %p38 = scmp.ne.s32.totalorder %s27, %s30
      %p39 = scmp.eq.s32.totalorder %s22, 1
      %p40 = por %p38, %p39
      %p41 = scmp.ne.s32.totalorder %s30, %s31
      %p42 = scmp.eq.s32.totalorder %s22, 0
      %p43 = por %p41, %p42
      %p44 = scmp.ne.s32.totalorder %s30, %s31
      %p45 = scmp.eq.s32.totalorder %s23, 1
      %p46 = por %p44, %p45
      %p48 = scmp.ne.s32.totalorder %s31, %s47
      %p49 = scmp.eq.s32.totalorder %s23, 0
      %p50 = por %p48, %p49
      %s52 = sadd.s32 %s51, 1
      %p55 = scmp.eq.s32.totalorder %s17, 1
      %p56 = scmp.ne.s32.totalorder %s51, %s53
      %p57 = scmp.eq.s32.totalorder %s17, 0
      %p58 = por %p56, %p57
      %p59 = scmp.ne.s32.totalorder %s51, %s53
      %p60 = scmp.eq.s32.totalorder %s22, 1
      %p61 = por %p59, %p60
      %p62 = scmp.ne.s32.totalorder %s53, %s54
      %p63 = scmp.eq.s32.totalorder %s22, 0
      %p64 = por %p62, %p63
      %p65 = scmp.ne.s32.totalorder %s53, %s54
      %p66 = scmp.eq.s32.totalorder %s23, 1
      %p67 = por %p65, %p66
      %p69 = scmp.ne.s32.totalorder %s54, %s68
      %p70 = scmp.eq.s32.totalorder %s23, 0
      %p71 = por %p69, %p70
      %s73 = sadd.s32 %s72, 1
      %p76 = scmp.eq.s32.totalorder %s17, 1
      %p77 = scmp.ne.s32.totalorder %s72, %s74
      %p78 = scmp.eq.s32.totalorder %s17, 0
      %p79 = por %p77, %p78
      %p80 = scmp.ne.s32.totalorder %s72, %s74
      %p81 = scmp.eq.s32.totalorder %s22, 1
      %p82 = por %p80, %p81
      %p83 = scmp.ne.s32.totalorder %s74, %s75
      %p84 = scmp.eq.s32.totalorder %s22, 0
      %p85 = por %p83, %p84
      %p86 = scmp.ne.s32.totalorder %s74, %s75
      %p87 = scmp.eq.s32.totalorder %s23, 1
      %p88 = por %p86, %p87
      %p90 = scmp.ne.s32.totalorder %s75, %s89
      %p91 = scmp.eq.s32.totalorder %s23, 0
      %p92 = por %p90, %p91
      %s93 = ssub.s32 %s17, %s24
      %p94 = scmp.eq.s32.totalorder %s93, 0
      %s96 = sadd.s32 %s95, 1
      %s97 = scalar_select %p94, %s95, %s96
      %p100 = pneg %p94
      %p101 = scmp.eq.s32.totalorder %s17, 1
      %p102 = por %p100, %p101
      %p103 = scmp.ne.s32.totalorder %s95, %s98
      %p104 = scmp.eq.s32.totalorder %s17, 0
      %p105 = por %p103, %p104
      %p106 = scmp.ne.s32.totalorder %s95, %s98
      %p107 = scmp.eq.s32.totalorder %s22, 1
      %p108 = por %p106, %p107
      %p109 = scmp.ne.s32.totalorder %s98, %s99
      %p110 = scmp.eq.s32.totalorder %s22, 0
      %p111 = por %p109, %p110
      %p112 = scmp.ne.s32.totalorder %s98, %s99
      %p113 = scmp.eq.s32.totalorder %s23, 1
      %p114 = por %p112, %p113
      %p116 = scmp.ne.s32.totalorder %s99, %s115
      %p117 = scmp.eq.s32.totalorder %s23, 0
      %p118 = por %p116, %p117
      %p119 = scmp.le.s32.totalorder 1, %s17
      %p120 = scmp.lt.s32.totalorder %s17, 3
      %p121 = pnand %p119, %p120
      %p122 = pneg %p121
      // Predicated region
      $region9: #{tpu_custom_call.1} parent=5 // pred_check
        _
      $region10: #{tpu_custom_call.1} parent=5 // pred_check_branch
        %124 = sbr.rel (%p121) target = $region12
      $region11: #{tpu_custom_call.1} parent=5 // pred_region
        %s125 = ssub.s32 %s17, 1
        // Predicated region
        $region13: #{tpu_custom_call.1} parent=11 // pred_check
          %p126 = pneg %p64
        $region14: #{tpu_custom_call.1} parent=11 // pred_check_branch
          %128 = sbr.rel (%p126) target = $region16
        $region15: #{tpu_custom_call.1} parent=11 // pred_region
          %s130 = ssub.s32 16, 16
          %131 = vsyncadd [#allocation5], %s130
          %s133 = sshll.u32 %s1, 4
          %s134 = int_to_ptr.vmem [resolvable:$true] %s133
          %136 = dma.vmem_to_smem %s134, 16, [#allocation6], [#allocation5]
        $region16: #{tpu_custom_call.1} parent=11 // pred_fallthru
          _
        // Predicated region
        $region17: #{tpu_custom_call.1} parent=11 // pred_check
          %p137 = pneg %p85
        $region18: #{tpu_custom_call.1} parent=11 // pred_check_branch
          %139 = sbr.rel (%p137) target = $region20
        $region19: #{tpu_custom_call.1} parent=11 // pred_region
          %s141 = ssub.s32 16, 16
          %142 = vsyncadd [#allocation8], %s141
          %s144 = sshll.u32 %s2, 4
          %s145 = int_to_ptr.vmem [resolvable:$true] %s144
          %147 = dma.vmem_to_smem %s145, 16, [#allocation7], [#allocation8]
        $region20: #{tpu_custom_call.1} parent=11 // pred_fallthru
          _
      $region12: #{tpu_custom_call.1} parent=5 // pred_fallthru
        _
      %p148 = scmp.lt.s32.totalorder %s17, 2
      // Predicated region
      $region21: #{tpu_custom_call.1} parent=5 // pred_check
        %p149 = pneg %p148
      $region22: #{tpu_custom_call.1} parent=5 // pred_check_branch
        %151 = sbr.rel (%p149) target = $region24
      $region23: #{tpu_custom_call.1} parent=5 // pred_region
        // Predicated region
        $region25: #{tpu_custom_call.1} parent=23 // pred_check
          %p152 = pneg %p37
        $region26: #{tpu_custom_call.1} parent=23 // pred_check_branch
          %154 = sbr.rel (%p152) target = $region28
        $region27: #{tpu_custom_call.1} parent=23 // pred_region
          %s155 = sand.u32 %s27, 1
          %s156 = scalar_lea.sflag [#allocation3], %s155
          %s157 = sand.u32 %s27, 1
          %s158 = smul.addr %s157, 32
          %s159 = scalar_lea.vmem [#allocation2], %s158
          %s161 = ssub.s32 512, 512
          %162 = vsyncadd %s156, %s161
          %s163 = smul.addr %s17, 4
          %s164 = smul.addr %s163, 128
          %s165 = scalar_lea.hbm %s0, %s164
          %s167 = sshll.u32 %s159, 4
          %s168 = int_to_ptr.vmem [resolvable:$true] %s167
          %170 = dma.hbm_to_vmem [thread:$0]  %s165, 512, %s168, %s156
        $region28: #{tpu_custom_call.1} parent=23 // pred_fallthru
          _
      $region24: #{tpu_custom_call.1} parent=5 // pred_fallthru
        _
      %p171 = scmp.le.s32.totalorder 1, %s17
      %p172 = scmp.lt.s32.totalorder %s17, 3
      %p173 = pnand %p171, %p172
      %p174 = pneg %p173
      // Predicated region
      $region29: #{tpu_custom_call.1} parent=5 // pred_check
        _
      $region30: #{tpu_custom_call.1} parent=5 // pred_check_branch
        %176 = sbr.rel (%p173) target = $region32
      $region31: #{tpu_custom_call.1} parent=5 // pred_region
        %s177 = ssub.s32 %s17, 1
        %s178 = sand.u32 %s30, 1
        %s179 = scalar_lea.sflag [#allocation3], %s178
        %s180 = sand.u32 %s30, 1
        %s181 = smul.addr %s180, 32
        %s182 = scalar_lea.vmem [#allocation2], %s181
        // Predicated region
        $region33: #{tpu_custom_call.1} parent=31 // pred_check
          %p183 = pneg %p43
        $region34: #{tpu_custom_call.1} parent=31 // pred_check_branch
          %185 = sbr.rel (%p183) target = $region36
        $region35: #{tpu_custom_call.1} parent=31 // pred_region
          %186 = dma.done %s179, 512
        $region36: #{tpu_custom_call.1} parent=31 // pred_fallthru
          _
        // Predicated region
        $region37: #{tpu_custom_call.1} parent=31 // pred_check
          %p187 = pneg %p64
        $region38: #{tpu_custom_call.1} parent=31 // pred_check_branch
          %189 = sbr.rel (%p187) target = $region40
        $region39: #{tpu_custom_call.1} parent=31 // pred_region
          %190 = dma.done [#allocation5], 16
        $region40: #{tpu_custom_call.1} parent=31 // pred_fallthru
          _
        // Predicated region
        $region41: #{tpu_custom_call.1} parent=31 // pred_check
          %p191 = pneg %p85
        $region42: #{tpu_custom_call.1} parent=31 // pred_check_branch
          %193 = sbr.rel (%p191) target = $region44
        $region43: #{tpu_custom_call.1} parent=31 // pred_region
          %194 = dma.done [#allocation8], 16
        $region44: #{tpu_custom_call.1} parent=31 // pred_fallthru
          _
        %195 = sfence
        %s196 = sand.u32 %s30, 1
        %s197 = scalar_lea.sflag [#allocation3], %s196
        %s198 = sand.u32 %s30, 1
        %s199 = smul.addr %s198, 32
        %s200 = scalar_lea.vmem [#allocation2], %s199
        %p201 = pneg %p43
        %p202 = pneg %p40
        %p203 = pneg %p64
        %p204 = pneg %p61
        %p205 = pneg %p85
        %p206 = pneg %p82
        %p207 = pneg %p111
        %p208 = pneg %p108
        %s209 = sand.u32 %s98, 1
        %s210 = scalar_lea.sflag [#allocation4], %s209
        %s211 = sand.u32 %s98, 1
        %s212 = smul.addr %s211, 64
        %s213 = scalar_lea.vmem [#allocation9], %s212
        %v214 = vld [vmem:[%s182] sm:$0xff]
        %215 = vrot.lane.b32.xlu0 %v214, 1
        %v216 = vpop.permute.xlu0 %215
        %217 = vrot.lane.b32.xlu0 %v214, 127
        %v218 = vpop.permute.xlu0 %217
        %s219 = sld [smem:[#allocation6]]
        %v220 = vstv %s219
        %v221 = vmul.f32 %v220, %v216
        %s222 = sld [smem:[#allocation6 + $0x1]]
        %v223 = vstv %s222
        %v224 = vmul.f32 %v223, %v214
        %v225 = vadd.f32 %v221, %v224
        %s226 = sld [smem:[#allocation6 + $0x2]]
        %v227 = vstv %s226
        %v228 = vmul.f32 %v227, %v218
        %v229 = vadd.f32 %v225, %v228
        %s230 = sld [smem:[#allocation6 + $0xc]]
        %v231 = vstv %s230
        %v232 = vmul.f32 %v231, %v216
        %s233 = sld [smem:[#allocation6 + $0xd]]
        %v234 = vstv %s233
        %v235 = vmul.f32 %v234, %v214
        %v236 = vadd.f32 %v232, %v235
        %s237 = sld [smem:[#allocation6 + $0xe]]
        %v238 = vstv %s237
        %v239 = vmul.f32 %v238, %v218
        %v240 = vadd.f32 %v236, %v239
        %s241 = sld [smem:[#allocation6 + $0x18]]
        %v242 = vstv %s241
        %v243 = vmul.f32 %v242, %v216
        %s244 = sld [smem:[#allocation6 + $0x19]]
        %v245 = vstv %s244
        %v246 = vmul.f32 %v245, %v214
        %v247 = vadd.f32 %v243, %v246
        %s248 = sld [smem:[#allocation6 + $0x1a]]
        %v249 = vstv %s248
        %v250 = vmul.f32 %v249, %v218
        %v251 = vadd.f32 %v247, %v250
        %s252 = sld [smem:[#allocation6 + $0x24]]
        %v253 = vstv %s252
        %v254 = vmul.f32 %v253, %v216
        %s255 = sld [smem:[#allocation6 + $0x25]]
        %v256 = vstv %s255
        %v257 = vmul.f32 %v256, %v214
        %v258 = vadd.f32 %v254, %v257
        %s259 = sld [smem:[#allocation6 + $0x26]]
        %v260 = vstv %s259
        %v261 = vmul.f32 %v260, %v218
        %v262 = vadd.f32 %v258, %v261
        %s263 = sld [smem:[#allocation6 + $0x30]]
        %v264 = vstv %s263
        %v265 = vmul.f32 %v264, %v216
        %s266 = sld [smem:[#allocation6 + $0x31]]
        %v267 = vstv %s266
        %v268 = vmul.f32 %v267, %v214
        %v269 = vadd.f32 %v265, %v268
        %s270 = sld [smem:[#allocation6 + $0x32]]
        %v271 = vstv %s270
        %v272 = vmul.f32 %v271, %v218
        %v273 = vadd.f32 %v269, %v272
        %s274 = sld [smem:[#allocation6 + $0x3c]]
        %v275 = vstv %s274
        %v276 = vmul.f32 %v275, %v216
        %s277 = sld [smem:[#allocation6 + $0x3d]]
        %v278 = vstv %s277
        %v279 = vmul.f32 %v278, %v214
        %v280 = vadd.f32 %v276, %v279
        %s281 = sld [smem:[#allocation6 + $0x3e]]
        %v282 = vstv %s281
        %v283 = vmul.f32 %v282, %v218
        %v284 = vadd.f32 %v280, %v283
        %s285 = sld [smem:[#allocation6 + $0x48]]
        %v286 = vstv %s285
        %v287 = vmul.f32 %v286, %v216
        %s288 = sld [smem:[#allocation6 + $0x49]]
        %v289 = vstv %s288
        %v290 = vmul.f32 %v289, %v214
        %v291 = vadd.f32 %v287, %v290
        %s292 = sld [smem:[#allocation6 + $0x4a]]
        %v293 = vstv %s292
        %v294 = vmul.f32 %v293, %v218
        %v295 = vadd.f32 %v291, %v294
        %s296 = sld [smem:[#allocation6 + $0x54]]
        %v297 = vstv %s296
        %v298 = vmul.f32 %v297, %v216
        %s299 = sld [smem:[#allocation6 + $0x55]]
        %v300 = vstv %s299
        %v301 = vmul.f32 %v300, %v214
        %v302 = vadd.f32 %v298, %v301
        %s303 = sld [smem:[#allocation6 + $0x56]]
        %v304 = vstv %s303
        %v305 = vmul.f32 %v304, %v218
        %v306 = vadd.f32 %v302, %v305
        %v307 = vld [vmem:[%s182 + $0x8] sm:$0xff]
        %308 = vrot.lane.b32.xlu0 %v307, 1
        %v309 = vpop.permute.xlu0 %308
        %310 = vrot.lane.b32.xlu0 %v307, 127
        %v311 = vpop.permute.xlu0 %310
        %s312 = sld [smem:[#allocation6 + $0x3]]
        %v313 = vstv %s312
        %v314 = vmul.f32 %v313, %v309
        %s315 = sld [smem:[#allocation6 + $0x4]]
        %v316 = vstv %s315
        %v317 = vmul.f32 %v316, %v307
        %v318 = vadd.f32 %v314, %v317
        %s319 = sld [smem:[#allocation6 + $0x5]]
        %v320 = vstv %s319
        %v321 = vmul.f32 %v320, %v311
        %v322 = vadd.f32 %v318, %v321
        %v323 = vadd.f32 %v229, %v322
        %s324 = sld [smem:[#allocation6 + $0xf]]
        %v325 = vstv %s324
        %v326 = vmul.f32 %v325, %v309
        %s327 = sld [smem:[#allocation6 + $0x10]]
        %v328 = vstv %s327
        %v329 = vmul.f32 %v328, %v307
        %v330 = vadd.f32 %v326, %v329
        %s331 = sld [smem:[#allocation6 + $0x11]]
        %v332 = vstv %s331
        %v333 = vmul.f32 %v332, %v311
        %v334 = vadd.f32 %v330, %v333
        %v335 = vadd.f32 %v240, %v334
        %s336 = sld [smem:[#allocation6 + $0x1b]]
        %v337 = vstv %s336
        %v338 = vmul.f32 %v337, %v309
        %s339 = sld [smem:[#allocation6 + $0x1c]]
        %v340 = vstv %s339
        %v341 = vmul.f32 %v340, %v307
        %v342 = vadd.f32 %v338, %v341
        %s343 = sld [smem:[#allocation6 + $0x1d]]
        %v344 = vstv %s343
        %v345 = vmul.f32 %v344, %v311
        %v346 = vadd.f32 %v342, %v345
        %v347 = vadd.f32 %v251, %v346
        %s348 = sld [smem:[#allocation6 + $0x27]]
        %v349 = vstv %s348
        %v350 = vmul.f32 %v349, %v309
        %s351 = sld [smem:[#allocation6 + $0x28]]
        %v352 = vstv %s351
        %v353 = vmul.f32 %v352, %v307
        %v354 = vadd.f32 %v350, %v353
        %s355 = sld [smem:[#allocation6 + $0x29]]
        %v356 = vstv %s355
        %v357 = vmul.f32 %v356, %v311
        %v358 = vadd.f32 %v354, %v357
        %v359 = vadd.f32 %v262, %v358
        %s360 = sld [smem:[#allocation6 + $0x33]]
        %v361 = vstv %s360
        %v362 = vmul.f32 %v361, %v309
        %s363 = sld [smem:[#allocation6 + $0x34]]
        %v364 = vstv %s363
        %v365 = vmul.f32 %v364, %v307
        %v366 = vadd.f32 %v362, %v365
        %s367 = sld [smem:[#allocation6 + $0x35]]
        %v368 = vstv %s367
        %v369 = vmul.f32 %v368, %v311
        %v370 = vadd.f32 %v366, %v369
        %v371 = vadd.f32 %v273, %v370
        %s372 = sld [smem:[#allocation6 + $0x3f]]
        %v373 = vstv %s372
        %v374 = vmul.f32 %v373, %v309
        %s375 = sld [smem:[#allocation6 + $0x40]]
        %v376 = vstv %s375
        %v377 = vmul.f32 %v376, %v307
        %v378 = vadd.f32 %v374, %v377
        %s379 = sld [smem:[#allocation6 + $0x41]]
        %v380 = vstv %s379
        %v381 = vmul.f32 %v380, %v311
        %v382 = vadd.f32 %v378, %v381
        %v383 = vadd.f32 %v284, %v382
        %s384 = sld [smem:[#allocation6 + $0x4b]]
        %v385 = vstv %s384
        %v386 = vmul.f32 %v385, %v309
        %s387 = sld [smem:[#allocation6 + $0x4c]]
        %v388 = vstv %s387
        %v389 = vmul.f32 %v388, %v307
        %v390 = vadd.f32 %v386, %v389
        %s391 = sld [smem:[#allocation6 + $0x4d]]
        %v392 = vstv %s391
        %v393 = vmul.f32 %v392, %v311
        %v394 = vadd.f32 %v390, %v393
        %v395 = vadd.f32 %v295, %v394
        %s396 = sld [smem:[#allocation6 + $0x57]]
        %v397 = vstv %s396
        %v398 = vmul.f32 %v397, %v309
        %s399 = sld [smem:[#allocation6 + $0x58]]
        %v400 = vstv %s399
        %v401 = vmul.f32 %v400, %v307
        %v402 = vadd.f32 %v398, %v401
        %s403 = sld [smem:[#allocation6 + $0x59]]
        %v404 = vstv %s403
        %v405 = vmul.f32 %v404, %v311
        %v406 = vadd.f32 %v402, %v405
        %v407 = vadd.f32 %v306, %v406
        %v408 = vld [vmem:[%s182 + $0x10] sm:$0xff]
        %409 = vrot.lane.b32.xlu0 %v408, 1
        %v410 = vpop.permute.xlu0 %409
        %411 = vrot.lane.b32.xlu0 %v408, 127
        %v412 = vpop.permute.xlu0 %411
        %s413 = sld [smem:[#allocation6 + $0x6]]
        %v414 = vstv %s413
        %v415 = vmul.f32 %v414, %v410
        %s416 = sld [smem:[#allocation6 + $0x7]]
        %v417 = vstv %s416
        %v418 = vmul.f32 %v417, %v408
        %v419 = vadd.f32 %v415, %v418
        %s420 = sld [smem:[#allocation6 + $0x8]]
        %v421 = vstv %s420
        %v422 = vmul.f32 %v421, %v412
        %v423 = vadd.f32 %v419, %v422
        %v424 = vadd.f32 %v323, %v423
        %s425 = sld [smem:[#allocation6 + $0x12]]
        %v426 = vstv %s425
        %v427 = vmul.f32 %v426, %v410
        %s428 = sld [smem:[#allocation6 + $0x13]]
        %v429 = vstv %s428
        %v430 = vmul.f32 %v429, %v408
        %v431 = vadd.f32 %v427, %v430
        %s432 = sld [smem:[#allocation6 + $0x14]]
        %v433 = vstv %s432
        %v434 = vmul.f32 %v433, %v412
        %v435 = vadd.f32 %v431, %v434
        %v436 = vadd.f32 %v335, %v435
        %s437 = sld [smem:[#allocation6 + $0x1e]]
        %v438 = vstv %s437
        %v439 = vmul.f32 %v438, %v410
        %s440 = sld [smem:[#allocation6 + $0x1f]]
        %v441 = vstv %s440
        %v442 = vmul.f32 %v441, %v408
        %v443 = vadd.f32 %v439, %v442
        %s444 = sld [smem:[#allocation6 + $0x20]]
        %v445 = vstv %s444
        %v446 = vmul.f32 %v445, %v412
        %v447 = vadd.f32 %v443, %v446
        %v448 = vadd.f32 %v347, %v447
        %s449 = sld [smem:[#allocation6 + $0x2a]]
        %v450 = vstv %s449
        %v451 = vmul.f32 %v450, %v410
        %s452 = sld [smem:[#allocation6 + $0x2b]]
        %v453 = vstv %s452
        %v454 = vmul.f32 %v453, %v408
        %v455 = vadd.f32 %v451, %v454
        %s456 = sld [smem:[#allocation6 + $0x2c]]
        %v457 = vstv %s456
        %v458 = vmul.f32 %v457, %v412
        %v459 = vadd.f32 %v455, %v458
        %v460 = vadd.f32 %v359, %v459
        %s461 = sld [smem:[#allocation6 + $0x36]]
        %v462 = vstv %s461
        %v463 = vmul.f32 %v462, %v410
        %s464 = sld [smem:[#allocation6 + $0x37]]
        %v465 = vstv %s464
        %v466 = vmul.f32 %v465, %v408
        %v467 = vadd.f32 %v463, %v466
        %s468 = sld [smem:[#allocation6 + $0x38]]
        %v469 = vstv %s468
        %v470 = vmul.f32 %v469, %v412
        %v471 = vadd.f32 %v467, %v470
        %v472 = vadd.f32 %v371, %v471
        %s473 = sld [smem:[#allocation6 + $0x42]]
        %v474 = vstv %s473
        %v475 = vmul.f32 %v474, %v410
        %s476 = sld [smem:[#allocation6 + $0x43]]
        %v477 = vstv %s476
        %v478 = vmul.f32 %v477, %v408
        %v479 = vadd.f32 %v475, %v478
        %s480 = sld [smem:[#allocation6 + $0x44]]
        %v481 = vstv %s480
        %v482 = vmul.f32 %v481, %v412
        %v483 = vadd.f32 %v479, %v482
        %v484 = vadd.f32 %v383, %v483
        %s485 = sld [smem:[#allocation6 + $0x4e]]
        %v486 = vstv %s485
        %v487 = vmul.f32 %v486, %v410
        %s488 = sld [smem:[#allocation6 + $0x4f]]
        %v489 = vstv %s488
        %v490 = vmul.f32 %v489, %v408
        %v491 = vadd.f32 %v487, %v490
        %s492 = sld [smem:[#allocation6 + $0x50]]
        %v493 = vstv %s492
        %v494 = vmul.f32 %v493, %v412
        %v495 = vadd.f32 %v491, %v494
        %v496 = vadd.f32 %v395, %v495
        %s497 = sld [smem:[#allocation6 + $0x5a]]
        %v498 = vstv %s497
        %v499 = vmul.f32 %v498, %v410
        %s500 = sld [smem:[#allocation6 + $0x5b]]
        %v501 = vstv %s500
        %v502 = vmul.f32 %v501, %v408
        %v503 = vadd.f32 %v499, %v502
        %s504 = sld [smem:[#allocation6 + $0x5c]]
        %v505 = vstv %s504
        %v506 = vmul.f32 %v505, %v412
        %v507 = vadd.f32 %v503, %v506
        %v508 = vadd.f32 %v407, %v507
        %v509 = vld [vmem:[%s182 + $0x18] sm:$0xff]
        %510 = vrot.lane.b32.xlu0 %v509, 1
        %v511 = vpop.permute.xlu0 %510
        %512 = vrot.lane.b32.xlu0 %v509, 127
        %v513 = vpop.permute.xlu0 %512
        %s514 = sld [smem:[#allocation6 + $0x9]]
        %v515 = vstv %s514
        %v516 = vmul.f32 %v515, %v511
        %s517 = sld [smem:[#allocation6 + $0xa]]
        %v518 = vstv %s517
        %v519 = vmul.f32 %v518, %v509
        %v520 = vadd.f32 %v516, %v519
        %s521 = sld [smem:[#allocation6 + $0xb]]
        %v522 = vstv %s521
        %v523 = vmul.f32 %v522, %v513
        %v524 = vadd.f32 %v520, %v523
        %v525 = vadd.f32 %v424, %v524
        %s526 = sld [smem:[#allocation6 + $0x15]]
        %v527 = vstv %s526
        %v528 = vmul.f32 %v527, %v511
        %s529 = sld [smem:[#allocation6 + $0x16]]
        %v530 = vstv %s529
        %v531 = vmul.f32 %v530, %v509
        %v532 = vadd.f32 %v528, %v531
        %s533 = sld [smem:[#allocation6 + $0x17]]
        %v534 = vstv %s533
        %v535 = vmul.f32 %v534, %v513
        %v536 = vadd.f32 %v532, %v535
        %v537 = vadd.f32 %v436, %v536
        %s538 = sld [smem:[#allocation6 + $0x21]]
        %v539 = vstv %s538
        %v540 = vmul.f32 %v539, %v511
        %s541 = sld [smem:[#allocation6 + $0x22]]
        %v542 = vstv %s541
        %v543 = vmul.f32 %v542, %v509
        %v544 = vadd.f32 %v540, %v543
        %s545 = sld [smem:[#allocation6 + $0x23]]
        %v546 = vstv %s545
        %v547 = vmul.f32 %v546, %v513
        %v548 = vadd.f32 %v544, %v547
        %v549 = vadd.f32 %v448, %v548
        %s550 = sld [smem:[#allocation6 + $0x2d]]
        %v551 = vstv %s550
        %v552 = vmul.f32 %v551, %v511
        %s553 = sld [smem:[#allocation6 + $0x2e]]
        %v554 = vstv %s553
        %v555 = vmul.f32 %v554, %v509
        %v556 = vadd.f32 %v552, %v555
        %s557 = sld [smem:[#allocation6 + $0x2f]]
        %v558 = vstv %s557
        %v559 = vmul.f32 %v558, %v513
        %v560 = vadd.f32 %v556, %v559
        %v561 = vadd.f32 %v460, %v560
        %s562 = sld [smem:[#allocation6 + $0x39]]
        %v563 = vstv %s562
        %v564 = vmul.f32 %v563, %v511
        %s565 = sld [smem:[#allocation6 + $0x3a]]
        %v566 = vstv %s565
        %v567 = vmul.f32 %v566, %v509
        %v568 = vadd.f32 %v564, %v567
        %s569 = sld [smem:[#allocation6 + $0x3b]]
        %v570 = vstv %s569
        %v571 = vmul.f32 %v570, %v513
        %v572 = vadd.f32 %v568, %v571
        %v573 = vadd.f32 %v472, %v572
        %s574 = sld [smem:[#allocation6 + $0x45]]
        %v575 = vstv %s574
        %v576 = vmul.f32 %v575, %v511
        %s577 = sld [smem:[#allocation6 + $0x46]]
        %v578 = vstv %s577
        %v579 = vmul.f32 %v578, %v509
        %v580 = vadd.f32 %v576, %v579
        %s581 = sld [smem:[#allocation6 + $0x47]]
        %v582 = vstv %s581
        %v583 = vmul.f32 %v582, %v513
        %v584 = vadd.f32 %v580, %v583
        %v585 = vadd.f32 %v484, %v584
        %s586 = sld [smem:[#allocation6 + $0x51]]
        %v587 = vstv %s586
        %v588 = vmul.f32 %v587, %v511
        %s589 = sld [smem:[#allocation6 + $0x52]]
        %v590 = vstv %s589
        %v591 = vmul.f32 %v590, %v509
        %v592 = vadd.f32 %v588, %v591
        %s593 = sld [smem:[#allocation6 + $0x53]]
        %v594 = vstv %s593
        %v595 = vmul.f32 %v594, %v513
        %v596 = vadd.f32 %v592, %v595
        %v597 = vadd.f32 %v496, %v596
        %s598 = sld [smem:[#allocation6 + $0x5d]]
        %v599 = vstv %s598
        %v600 = vmul.f32 %v599, %v511
        %s601 = sld [smem:[#allocation6 + $0x5e]]
        %v602 = vstv %s601
        %v603 = vmul.f32 %v602, %v509
        %v604 = vadd.f32 %v600, %v603
        %s605 = sld [smem:[#allocation6 + $0x5f]]
        %v606 = vstv %s605
        %v607 = vmul.f32 %v606, %v513
        %v608 = vadd.f32 %v604, %v607
        %v609 = vadd.f32 %v508, %v608
        %s610 = sld [smem:[#allocation7]]
        %v611 = vstv %s610
        %v612 = vadd.f32 %v525, %v611
        %613 = vst [vmem:[%s213] sm:$0xff] %v612
        %s614 = sld [smem:[#allocation7 + $0x1]]
        %v615 = vstv %s614
        %v616 = vadd.f32 %v537, %v615
        %617 = vst [vmem:[%s213 + $0x8] sm:$0xff] %v616
        %s618 = sld [smem:[#allocation7 + $0x2]]
        %v619 = vstv %s618
        %v620 = vadd.f32 %v549, %v619
        %621 = vst [vmem:[%s213 + $0x10] sm:$0xff] %v620
        %s622 = sld [smem:[#allocation7 + $0x3]]
        %v623 = vstv %s622
        %v624 = vadd.f32 %v561, %v623
        %625 = vst [vmem:[%s213 + $0x18] sm:$0xff] %v624
        %s626 = sld [smem:[#allocation7 + $0x4]]
        %v627 = vstv %s626
        %v628 = vadd.f32 %v573, %v627
        %629 = vst [vmem:[%s213 + $0x20] sm:$0xff] %v628
        %s630 = sld [smem:[#allocation7 + $0x5]]
        %v631 = vstv %s630
        %v632 = vadd.f32 %v585, %v631
        %633 = vst [vmem:[%s213 + $0x28] sm:$0xff] %v632
        %s634 = sld [smem:[#allocation7 + $0x6]]
        %v635 = vstv %s634
        %v636 = vadd.f32 %v597, %v635
        %637 = vst [vmem:[%s213 + $0x30] sm:$0xff] %v636
        %s638 = sld [smem:[#allocation7 + $0x7]]
        %v639 = vstv %s638
        %v640 = vadd.f32 %v609, %v639
        %641 = vst [vmem:[%s213 + $0x38] sm:$0xff] %v640
        %s642 = sand.u32 %s98, 1
        %s643 = scalar_lea.sflag [#allocation4], %s642
        %s644 = sand.u32 %s98, 1
        %s645 = smul.addr %s644, 64
        %s646 = scalar_lea.vmem [#allocation9], %s645
        // Predicated region
        $region45: #{tpu_custom_call.1} parent=31 // pred_check
          %p647 = pneg %p108
        $region46: #{tpu_custom_call.1} parent=31 // pred_check_branch
          %649 = sbr.rel (%p647) target = $region48
        $region47: #{tpu_custom_call.1} parent=31 // pred_region
          %s651 = ssub.s32 1024, 1024
          %652 = vsyncadd %s643, %s651
          %s653 = smul.addr %s22, 8
          %s654 = smul.addr %s653, 128
          %s655 = scalar_lea.hbm %s3, %s654
          %s657 = sshll.u32 %s646, 4
          %s658 = int_to_ptr.vmem [resolvable:$true] %s657
          %660 = dma.vmem_to_hbm [thread:$0]  %s658, 1024, %s655, %s643
        $region48: #{tpu_custom_call.1} parent=31 // pred_fallthru
          _
      $region32: #{tpu_custom_call.1} parent=5 // pred_fallthru
        _
      %p661 = scmp.le.s32.totalorder 2, %s17
      // Predicated region
      $region49: #{tpu_custom_call.1} parent=5 // pred_check
        %p662 = pneg %p661
      $region50: #{tpu_custom_call.1} parent=5 // pred_check_branch
        %664 = sbr.rel (%p662) target = $region52
      $region51: #{tpu_custom_call.1} parent=5 // pred_region
        %s665 = ssub.s32 %s17, 2
        // Predicated region
        $region53: #{tpu_custom_call.1} parent=51 // pred_check
          %p666 = pneg %p114
        $region54: #{tpu_custom_call.1} parent=51 // pred_check_branch
          %668 = sbr.rel (%p666) target = $region56
        $region55: #{tpu_custom_call.1} parent=51 // pred_region
          %s669 = sand.u32 %s99, 1
          %s670 = scalar_lea.sflag [#allocation4], %s669
          %s671 = sand.u32 %s99, 1
          %s672 = smul.addr %s671, 64
          %s673 = scalar_lea.vmem [#allocation9], %s672
          %674 = dma.done %s670, 1024
        $region56: #{tpu_custom_call.1} parent=51 // pred_fallthru
          _
      $region52: #{tpu_custom_call.1} parent=5 // pred_fallthru
        _
    $region6: #{tpu_custom_call.1} parent=1 // loop_footer
      %s21 = sadd.s32 1, %s17
    $region7: #{tpu_custom_call.1} parent=1 // loop_footer_branch
      %16 = sbr.rel target = $region3
    $region8: #{tpu_custom_call.1} parent=1 // loop_exit
      _
    %675 = vsyncpa [#allocation3], 1
    %s676 = scalar_lea.sflag [#allocation3], 1
    %677 = vsyncpa %s676, 1
    %678 = vsyncpa [#allocation4], 1
    %s679 = scalar_lea.sflag [#allocation4], 1
    %680 = vsyncpa %s679, 1
    %681 = vsyncpa [#allocation5], 1
    %s682 = scalar_lea.sflag [#allocation5], 1
    %683 = vsyncpa %s682, 1
    %684 = vsyncpa [#allocation8], 1

</llo_original>
